<compile_context>
chip_gen: v7x
topology: tpu7x:2x2x1
jax: 0.10.0
libtpu: 0.0.40
codegen_flags: <defaults>
</compile_context>

<pallas_src>
import jax
import jax.numpy as jnp
from jax.experimental import pallas as pl
from jax.experimental.pallas import tpu as pltpu

FEATURE_DICT = {"resnet18": 512, "resnet34": 512, "resnet50": 2048, "resnet101": 2048}


def _fc_kernel(x_ref, w_ref, b_ref, o_ref):
    # Single-shot FC: bf16 operands on the MXU, f32 accumulation, bias folded
    # into the epilogue. No scratch, no reduction grid.
    acc = jnp.dot(x_ref[...], w_ref[...], preferred_element_type=jnp.float32)
    o_ref[...] = (acc + b_ref[...]).astype(o_ref.dtype)


def classifier_forward(feature, w, b, *, batch_tile=128):
    """feature: (B, C, H, W) or (B, F).  w: (F, classes).  b: (classes,)."""
    x = feature.reshape(feature.shape[0], -1)  # torch.flatten(feature, 1)
    B, F = x.shape
    C = w.shape[1]
    out_dtype = x.dtype

    # --- Lane-dense class dimension: pad C up to a multiple of 128. ---------
    Cp = max(128, ((C + 127) // 128) * 128)
    w_p = jnp.pad(w, ((0, 0), (0, Cp - C)))
    b_p = jnp.pad(b.astype(jnp.float32), (0, Cp - C)).reshape(1, Cp)

    # --- bf16 MXU operands (accumulation stays f32 inside the kernel). ------
    x_bf = x.astype(jnp.bfloat16)
    w_bf = w_p.astype(jnp.bfloat16)

    # --- Sublane-aligned batch padding + optional batch tiling. -------------
    B8 = ((B + 7) // 8) * 8                  # sublane-aligned batch
    tb = min(batch_tile, B8)                 # tile is either full B8 or 128
    Bp = ((B8 + tb - 1) // tb) * tb          # grid-divisible padded batch
    if Bp != B:
        x_bf = jnp.pad(x_bf, ((0, Bp - B), (0, 0)))

    out = pl.pallas_call(
        _fc_kernel,
        out_shape=jax.ShapeDtypeStruct((Bp, Cp), out_dtype),
        grid_spec=pltpu.PrefetchScalarGridSpec(
            num_scalar_prefetch=0,
            grid=(Bp // tb,),
            in_specs=[
                pl.BlockSpec((tb, F), lambda i: (i, 0)),   # x batch tile
                pl.BlockSpec((F, Cp), lambda i: (0, 0)),   # full weight (resident)
                pl.BlockSpec((1, Cp), lambda i: (0, 0)),   # bias (resident)
            ],
            out_specs=pl.BlockSpec((tb, Cp), lambda i: (i, 0)),
        ),
        compiler_params=pltpu.CompilerParams(
            dimension_semantics=("parallel",)  # batch axis; splits TCs on v7x
        ),
    )(x_bf, w_bf, b_p)

    # Slice back to the real batch / class extents.
    return out[:B, :C]


if __name__ == "__main__":
    backbone = "resnet18"
    F = FEATURE_DICT[backbone]   # 512
    classes = 65
    B = 8

    key = jax.random.PRNGKey(0)
    kx, kw, kb = jax.random.split(key, 3)

    # Backbone feature map (NCHW, already globally pooled -> spatial 1x1).
    feature = jax.random.normal(kx, (B, F, 1, 1), dtype=jnp.float32)

    # Deterministic parameter init (shapes per nn.Linear(512, 65)).
    bound = 1.0 / jnp.sqrt(jnp.float32(F))
    w = jax.random.uniform(kw, (F, classes), minval=-bound, maxval=bound,
                           dtype=jnp.float32)
    b = jax.random.uniform(kb, (classes,), minval=-bound, maxval=bound,
                           dtype=jnp.float32)

    out = classifier_forward(feature, w, b)
    out = jax.block_until_ready(out)

    # Reference checks.
    x2 = feature.reshape(B, -1)
    ref_f32 = x2 @ w + b                                              # exact math
    ref_bf16 = jnp.dot(x2.astype(jnp.bfloat16), w.astype(jnp.bfloat16),
                       preferred_element_type=jnp.float32) + b        # same precision path
    assert out.shape == (B, classes)
    assert jnp.allclose(out, ref_bf16, atol=1e-3, rtol=1e-3), "mismatch vs bf16 reference"
    assert jnp.allclose(out, ref_f32, atol=5e-2, rtol=5e-2), "mismatch vs f32 reference"

    print("KERNEL_OK")
</pallas_src>

<mosaic_0001>
module attributes {stable_mosaic.version = 11 : i64} {
  func.func @_fc_kernel(%arg0: i32, %arg1: memref<8x512xbf16, #tpu.memory_space<vmem>>, %arg2: memref<512x128xbf16, #tpu.memory_space<vmem>>, %arg3: memref<1x128xf32, #tpu.memory_space<vmem>>, %arg4: memref<8x128xf32, #tpu.memory_space<vmem>>) attributes {dimension_semantics = [#tpu.dimension_semantics<parallel>], iteration_bounds = array<i64: 1>, scalar_prefetch = 0 : i64, scratch_operands = 0 : i64, tpu.core_type = #tpu.core_type<tc>, window_params = [{transform_indices = @transform_0, window_bounds = array<i64: 8, 512>}, {pipeline_mode = #tpu.pipeline_mode<synchronous>, transform_indices = @transform_1, window_bounds = array<i64: 512, 128>}, {pipeline_mode = #tpu.pipeline_mode<synchronous>, transform_indices = @transform_2, window_bounds = array<i64: 1, 128>}, {transform_indices = @transform_3, window_bounds = array<i64: 8, 128>}]} {
    %c0 = arith.constant 0 : index
    %c0_0 = arith.constant 0 : index
    %0 = vector.load %arg1[%c0, %c0_0] : memref<8x512xbf16, #tpu.memory_space<vmem>>, vector<8x512xbf16>
    %c0_1 = arith.constant 0 : index
    %c0_2 = arith.constant 0 : index
    %1 = vector.load %arg2[%c0_1, %c0_2] : memref<512x128xbf16, #tpu.memory_space<vmem>>, vector<512x128xbf16>
    %cst = arith.constant dense<0.000000e+00> : vector<8x128xf32>
    %2 = tpu.matmul %0, %1, %cst {dimension_numbers = #tpu.dot_dimension_numbers<[1], [0], [0], [1], [0, 0, 1, 1], [], []>} : vector<8x512xbf16>, vector<512x128xbf16>, vector<8x128xf32> -> vector<8x128xf32>
    %c0_3 = arith.constant 0 : index
    %c0_4 = arith.constant 0 : index
    %3 = vector.load %arg3[%c0_3, %c0_4] : memref<1x128xf32, #tpu.memory_space<vmem>>, vector<1x128xf32>
    %4 = vector.broadcast %3 : vector<1x128xf32> to vector<8x128xf32>
    %5 = arith.addf %2, %4 : vector<8x128xf32>
    %c0_5 = arith.constant 0 : index
    %c0_6 = arith.constant 0 : index
    %6 = vector.load %arg4[%c0_5, %c0_6] : memref<8x128xf32, #tpu.memory_space<vmem>>, vector<8x128xf32>
    tpu.vector_store %arg4[%c0_5, %c0_6], %5 {strides = array<i32>} : memref<8x128xf32, #tpu.memory_space<vmem>>, vector<8x128xf32>,
    return
  }
  func.func @transform_0(%arg0: i32) -> (i32, i32) {
    %c0_i32 = arith.constant 0 : i32
    %c0_i32_0 = arith.constant 0 : i32
    return %arg0, %c0_i32 : i32, i32
  }
  func.func @transform_1(%arg0: i32) -> (i32, i32) {
    %c0_i32 = arith.constant 0 : i32
    %c0_i32_0 = arith.constant 0 : i32
    %c0_i32_1 = arith.constant 0 : i32
    return %c0_i32, %c0_i32_0 : i32, i32
  }
  func.func @transform_2(%arg0: i32) -> (i32, i32) {
    %c0_i32 = arith.constant 0 : i32
    %c0_i32_0 = arith.constant 0 : i32
    %c0_i32_1 = arith.constant 0 : i32
    return %c0_i32, %c0_i32_0 : i32, i32
  }
  func.func @transform_3(%arg0: i32) -> (i32, i32) {
    %c0_i32 = arith.constant 0 : i32
    %c0_i32_0 = arith.constant 0 : i32
    return %arg0, %c0_i32 : i32, i32
  }
}

</mosaic_0001>

<llo_original>
// kernel: tpu_custom_call.1
$region0: #{tpu_custom_call.1}
  #allocation0 [shape = 'u32[]', space=smem, size = 0x4, offset = 0x4, fixed_abs, tag = 'smem constant byte address 0x4 - core index']
  #allocation1 [shape = 'u32[144,128]{1,0:T(1,128)}', space=vmem, size = 0x12000, scoped, tag = 'internal scratch']
  %s0 = inlined_call_operand.hbm [shape: bf16[8,512], index: 0, kind: input, shape index: {}]
  %s1 = inlined_call_operand.hbm [shape: bf16[512,128], index: 1, kind: input, shape index: {}]
  %s2 = inlined_call_operand.vmem [shape: f32[1,128], index: 2, kind: input, shape index: {}]
  %s3 = inlined_call_operand.hbm [shape: f32[8,128], index: 3, kind: output, shape index: {}]
  %s4 = sld [smem:[#allocation0]]
  $region30: #{tpu_custom_call.1} parent=0
    _
  %s6 = ssub.s32 1, %s4
  %s7 = scalar_select 0, %s6, %s4
  $region1: #{tpu_custom_call.1} parent=0
    #allocation2 [shape = 'u8[8192]{0}', space=vmem, size = 0x2000, scoped, tag = 'input window, operand 0, single buffered']
    #allocation3 [shape = 's32[1]{0}', space=sflag, size = 0x4, scoped, tag = 'scoped memory for tpu_custom_call.1']
    #allocation4 [shape = 's32[1]{0}', space=sflag, size = 0x4, scoped, tag = 'scoped memory for tpu_custom_call.1']
    #allocation5 [shape = 'u8[131072]{0}', space=vmem, size = 0x20000, scoped, tag = 'input window, operand 1, single buffered']
    #allocation6 [shape = 's32[1]{0}', space=sflag, size = 0x4, scoped, tag = 'scoped memory for tpu_custom_call.1']
    #allocation7 [shape = 'u8[4096]{0}', space=vmem, size = 0x1000, scoped, tag = 'output window, operand 0, single buffered']
    %8 = vsyncpa [#allocation3], 0
    %9 = vsyncpa [#allocation6], 0
    %10 = vsyncpa [#allocation4], 0
    // Predicated region
    $region2: #{tpu_custom_call.1} parent=1 // pred_check
      _
    $region3: #{tpu_custom_call.1} parent=1 // pred_check_branch
      %12 = sbr.rel (0) target = $region5
    $region4: #{tpu_custom_call.1} parent=1 // pred_region
      %s14 = ssub.s32 256, 256
      %15 = vsyncadd [#allocation3], %s14
      %s17 = sshll.u32 [#allocation2], 4
      %s18 = int_to_ptr.vmem [resolvable:$true] %s17
      %20 = dma.hbm_to_vmem [thread:$0]  %s0, 256, %s18, [#allocation3]
    $region5: #{tpu_custom_call.1} parent=1 // pred_fallthru
      _
    // Predicated region
    $region6: #{tpu_custom_call.1} parent=1 // pred_check
      _
    $region7: #{tpu_custom_call.1} parent=1 // pred_check_branch
      %22 = sbr.rel (0) target = $region9
    $region8: #{tpu_custom_call.1} parent=1 // pred_region
      %s24 = ssub.s32 4096, 4096
      %25 = vsyncadd [#allocation6], %s24
      %s26 = sshll.u32 [#allocation5], 4
      %s27 = int_to_ptr.vmem [resolvable:$true] %s26
      %32 = dma.hbm_to_vmem [thread:$0]  %s1, 4096, %s27, [#allocation6], 64, 64, 4
    $region9: #{tpu_custom_call.1} parent=1 // pred_fallthru
      _
    // Predicated region
    $region10: #{tpu_custom_call.1} parent=1 // pred_check
      _
    $region11: #{tpu_custom_call.1} parent=1 // pred_check_branch
      %34 = sbr.rel (0) target = $region13
    $region12: #{tpu_custom_call.1} parent=1 // pred_region
      _
    $region13: #{tpu_custom_call.1} parent=1 // pred_fallthru
      _
    // Predicated region
    $region14: #{tpu_custom_call.1} parent=1 // pred_check
      _
    $region15: #{tpu_custom_call.1} parent=1 // pred_check_branch
      %36 = sbr.rel (0) target = $region17
    $region16: #{tpu_custom_call.1} parent=1 // pred_region
      %37 = dma.done [#allocation3], 256
    $region17: #{tpu_custom_call.1} parent=1 // pred_fallthru
      _
    // Predicated region
    $region18: #{tpu_custom_call.1} parent=1 // pred_check
      _
    $region19: #{tpu_custom_call.1} parent=1 // pred_check_branch
      %39 = sbr.rel (0) target = $region21
    $region20: #{tpu_custom_call.1} parent=1 // pred_region
      %40 = dma.done [#allocation6], 4096
    $region21: #{tpu_custom_call.1} parent=1 // pred_fallthru
      _
    %v42 = vld [vmem:[#allocation2] sm:$0xff]
    %v43 = vld [vmem:[#allocation2 + $0x8] sm:$0xff]
    %v44 = vld [vmem:[#allocation5] sm:$0xf]
    %v45 = vld [vmem:[#allocation5 + $0x4] sm:$0xf]
    %v46 = vld [vmem:[#allocation5 + $0x8] sm:$0xf]
    %v47 = vld [vmem:[#allocation5 + $0xc] sm:$0xf]
    %v48 = vld [vmem:[#allocation5 + $0x10] sm:$0xf]
    %v49 = vld [vmem:[#allocation5 + $0x14] sm:$0xf]
    %v50 = vld [vmem:[#allocation5 + $0x18] sm:$0xf]
    %v51 = vld [vmem:[#allocation5 + $0x1c] sm:$0xf]
    %v52 = vld [vmem:[#allocation5 + $0x20] sm:$0xf]
    %v53 = vld [vmem:[#allocation5 + $0x24] sm:$0xf]
    %v54 = vld [vmem:[#allocation5 + $0x28] sm:$0xf]
    %v55 = vld [vmem:[#allocation5 + $0x2c] sm:$0xf]
    %v56 = vld [vmem:[#allocation5 + $0x30] sm:$0xf]
    %v57 = vld [vmem:[#allocation5 + $0x34] sm:$0xf]
    %v58 = vld [vmem:[#allocation5 + $0x38] sm:$0xf]
    %v59 = vld [vmem:[#allocation5 + $0x3c] sm:$0xf]
    %v60 = vld [vmem:[#allocation5 + $0x40] sm:$0xf]
    %v61 = vld [vmem:[#allocation5 + $0x44] sm:$0xf]
    %v62 = vld [vmem:[#allocation5 + $0x48] sm:$0xf]
    %v63 = vld [vmem:[#allocation5 + $0x4c] sm:$0xf]
    %v64 = vld [vmem:[#allocation5 + $0x50] sm:$0xf]
    %v65 = vld [vmem:[#allocation5 + $0x54] sm:$0xf]
    %v66 = vld [vmem:[#allocation5 + $0x58] sm:$0xf]
    %v67 = vld [vmem:[#allocation5 + $0x5c] sm:$0xf]
    %v68 = vld [vmem:[#allocation5 + $0x60] sm:$0xf]
    %v69 = vld [vmem:[#allocation5 + $0x64] sm:$0xf]
    %v70 = vld [vmem:[#allocation5 + $0x68] sm:$0xf]
    %v71 = vld [vmem:[#allocation5 + $0x6c] sm:$0xf]
    %v72 = vld [vmem:[#allocation5 + $0x70] sm:$0xf]
    %v73 = vld [vmem:[#allocation5 + $0x74] sm:$0xf]
    %v74 = vld [vmem:[#allocation5 + $0x78] sm:$0xf]
    %v75 = vld [vmem:[#allocation5 + $0x7c] sm:$0xf]
    %v76 = vld [vmem:[#allocation5 + $0x80] sm:$0xf]
    %v77 = vld [vmem:[#allocation5 + $0x84] sm:$0xf]
    %v78 = vld [vmem:[#allocation5 + $0x88] sm:$0xf]
    %v79 = vld [vmem:[#allocation5 + $0x8c] sm:$0xf]
    %v80 = vld [vmem:[#allocation5 + $0x90] sm:$0xf]
    %v81 = vld [vmem:[#allocation5 + $0x94] sm:$0xf]
    %v82 = vld [vmem:[#allocation5 + $0x98] sm:$0xf]
    %v83 = vld [vmem:[#allocation5 + $0x9c] sm:$0xf]
    %v84 = vld [vmem:[#allocation5 + $0xa0] sm:$0xf]
    %v85 = vld [vmem:[#allocation5 + $0xa4] sm:$0xf]
    %v86 = vld [vmem:[#allocation5 + $0xa8] sm:$0xf]
    %v87 = vld [vmem:[#allocation5 + $0xac] sm:$0xf]
    %v88 = vld [vmem:[#allocation5 + $0xb0] sm:$0xf]
    %v89 = vld [vmem:[#allocation5 + $0xb4] sm:$0xf]
    %v90 = vld [vmem:[#allocation5 + $0xb8] sm:$0xf]
    %v91 = vld [vmem:[#allocation5 + $0xbc] sm:$0xf]
    %v92 = vld [vmem:[#allocation5 + $0xc0] sm:$0xf]
    %v93 = vld [vmem:[#allocation5 + $0xc4] sm:$0xf]
    %v94 = vld [vmem:[#allocation5 + $0xc8] sm:$0xf]
    %v95 = vld [vmem:[#allocation5 + $0xcc] sm:$0xf]
    %v96 = vld [vmem:[#allocation5 + $0xd0] sm:$0xf]
    %v97 = vld [vmem:[#allocation5 + $0xd4] sm:$0xf]
    %v98 = vld [vmem:[#allocation5 + $0xd8] sm:$0xf]
    %v99 = vld [vmem:[#allocation5 + $0xdc] sm:$0xf]
    %v100 = vld [vmem:[#allocation5 + $0xe0] sm:$0xf]
    %v101 = vld [vmem:[#allocation5 + $0xe4] sm:$0xf]
    %v102 = vld [vmem:[#allocation5 + $0xe8] sm:$0xf]
    %v103 = vld [vmem:[#allocation5 + $0xec] sm:$0xf]
    %v104 = vld [vmem:[#allocation5 + $0xf0] sm:$0xf]
    %v105 = vld [vmem:[#allocation5 + $0xf4] sm:$0xf]
    %v106 = vld [vmem:[#allocation5 + $0xf8] sm:$0xf]
    %v107 = vld [vmem:[#allocation5 + $0xfc] sm:$0xf]
    %v108 = vld [vmem:[%s2] sm:$0x1]
    %v110 = vlaneseq
    %v111 = vshrl.u32 %v110, 7
    %v112 = vsub.s32 0, %v111
    %v113 = vrot.slane %v108, %v112
    %v117 = vunpack.c.l.b16 %v42
    %v118 = vunpack.c.h.b16 %v42
    %v119 = vunpack.c.l.b16 %v43
    %v120 = vunpack.c.h.b16 %v43
    %v121 = vpack.c.b16 %v117, %v117
    %v122 = vpack.c.b16 %v118, %v118
    %v123 = vpack.c.b16 %v119, %v119
    %v124 = vpack.c.b16 %v120, %v120
    %v193 = vunpack.c.l.b16 %v44
    %v194 = vunpack.c.l.b16 %v45
    %v195 = vunpack.c.l.b16 %v46
    %v196 = vunpack.c.l.b16 %v47
    %v197 = vunpack.c.l.b16 %v48
    %v198 = vunpack.c.l.b16 %v49
    %v199 = vunpack.c.l.b16 %v50
    %v200 = vunpack.c.l.b16 %v51
    %v201 = vunpack.c.l.b16 %v52
    %v202 = vunpack.c.l.b16 %v53
    %v203 = vunpack.c.l.b16 %v54
    %v204 = vunpack.c.l.b16 %v55
    %v205 = vunpack.c.l.b16 %v56
    %v206 = vunpack.c.l.b16 %v57
    %v207 = vunpack.c.l.b16 %v58
    %v208 = vunpack.c.l.b16 %v59
    %v209 = vunpack.c.l.b16 %v60
    %v210 = vunpack.c.l.b16 %v61
    %v211 = vunpack.c.l.b16 %v62
    %v212 = vunpack.c.l.b16 %v63
    %v213 = vunpack.c.l.b16 %v64
    %v214 = vunpack.c.l.b16 %v65
    %v215 = vunpack.c.l.b16 %v66
    %v216 = vunpack.c.l.b16 %v67
    %v217 = vunpack.c.l.b16 %v68
    %v218 = vunpack.c.l.b16 %v69
    %v219 = vunpack.c.l.b16 %v70
    %v220 = vunpack.c.l.b16 %v71
    %v221 = vunpack.c.l.b16 %v72
    %v222 = vunpack.c.l.b16 %v73
    %v223 = vunpack.c.l.b16 %v74
    %v224 = vunpack.c.l.b16 %v75
    %v225 = vunpack.c.l.b16 %v76
    %v226 = vunpack.c.l.b16 %v77
    %v227 = vunpack.c.l.b16 %v78
    %v228 = vunpack.c.l.b16 %v79
    %v229 = vunpack.c.l.b16 %v80
    %v230 = vunpack.c.l.b16 %v81
    %v231 = vunpack.c.l.b16 %v82
    %v232 = vunpack.c.l.b16 %v83
    %v233 = vunpack.c.l.b16 %v84
    %v234 = vunpack.c.l.b16 %v85
    %v235 = vunpack.c.l.b16 %v86
    %v236 = vunpack.c.l.b16 %v87
    %v237 = vunpack.c.l.b16 %v88
    %v238 = vunpack.c.l.b16 %v89
    %v239 = vunpack.c.l.b16 %v90
    %v240 = vunpack.c.l.b16 %v91
    %v241 = vunpack.c.l.b16 %v92
    %v242 = vunpack.c.l.b16 %v93
    %v243 = vunpack.c.l.b16 %v94
    %v244 = vunpack.c.l.b16 %v95
    %v245 = vunpack.c.l.b16 %v96
    %v246 = vunpack.c.l.b16 %v97
    %v247 = vunpack.c.l.b16 %v98
    %v248 = vunpack.c.l.b16 %v99
    %v249 = vunpack.c.l.b16 %v100
    %v250 = vunpack.c.l.b16 %v101
    %v251 = vunpack.c.l.b16 %v102
    %v252 = vunpack.c.l.b16 %v103
    %v253 = vunpack.c.l.b16 %v104
    %v254 = vunpack.c.l.b16 %v105
    %v255 = vunpack.c.l.b16 %v106
    %v256 = vunpack.c.l.b16 %v107
    %v257 = vpack.c.b16 %v194, %v193
    %v258 = vpack.c.b16 %v196, %v195
    %v259 = vpack.c.b16 %v198, %v197
    %v260 = vpack.c.b16 %v200, %v199
    %v261 = vpack.c.b16 %v202, %v201
    %v262 = vpack.c.b16 %v204, %v203
    %v263 = vpack.c.b16 %v206, %v205
    %v264 = vpack.c.b16 %v208, %v207
    %v265 = vpack.c.b16 %v210, %v209
    %v266 = vpack.c.b16 %v212, %v211
    %v267 = vpack.c.b16 %v214, %v213
    %v268 = vpack.c.b16 %v216, %v215
    %v269 = vpack.c.b16 %v218, %v217
    %v270 = vpack.c.b16 %v220, %v219
    %v271 = vpack.c.b16 %v222, %v221
    %v272 = vpack.c.b16 %v224, %v223
    %v273 = vpack.c.b16 %v226, %v225
    %v274 = vpack.c.b16 %v228, %v227
    %v275 = vpack.c.b16 %v230, %v229
    %v276 = vpack.c.b16 %v232, %v231
    %v277 = vpack.c.b16 %v234, %v233
    %v278 = vpack.c.b16 %v236, %v235
    %v279 = vpack.c.b16 %v238, %v237
    %v280 = vpack.c.b16 %v240, %v239
    %v281 = vpack.c.b16 %v242, %v241
    %v282 = vpack.c.b16 %v244, %v243
    %v283 = vpack.c.b16 %v246, %v245
    %v284 = vpack.c.b16 %v248, %v247
    %v285 = vpack.c.b16 %v250, %v249
    %v286 = vpack.c.b16 %v252, %v251
    %v287 = vpack.c.b16 %v254, %v253
    %v288 = vpack.c.b16 %v256, %v255
    %321 = vmatprep.subr.bf16.mxu0 0
    %322 = vmatpush1.bf16.msra.mxu0 %v257
    %323 = vmatprep.subr.bf16.mxu0 0
    %324 = vmatpush1.bf16.msra.mxu0 %v258
    %325 = vmatprep.subr.bf16.mxu0 0
    %326 = vmatpush1.bf16.msra.mxu0 %v259
    %327 = vmatprep.subr.bf16.mxu0 0
    %328 = vmatpush1.bf16.msra.mxu0 %v260
    %329 = vmatprep.subr.bf16.mxu0 0
    %330 = vmatpush1.bf16.msra.mxu0 %v261
    %331 = vmatprep.subr.bf16.mxu0 0
    %332 = vmatpush1.bf16.msra.mxu0 %v262
    %333 = vmatprep.subr.bf16.mxu0 0
    %334 = vmatpush1.bf16.msra.mxu0 %v263
    %335 = vmatprep.subr.bf16.mxu0 0
    %336 = vmatpush1.bf16.msra.mxu0 %v264
    %337 = vmatprep.subr.bf16.mxu0 0
    %338 = vmatpush1.bf16.msra.mxu0 %v265
    %339 = vmatprep.subr.bf16.mxu0 0
    %340 = vmatpush1.bf16.msra.mxu0 %v266
    %341 = vmatprep.subr.bf16.mxu0 0
    %342 = vmatpush1.bf16.msra.mxu0 %v267
    %343 = vmatprep.subr.bf16.mxu0 0
    %344 = vmatpush1.bf16.msra.mxu0 %v268
    %345 = vmatprep.subr.bf16.mxu0 0
    %346 = vmatpush1.bf16.msra.mxu0 %v269
    %347 = vmatprep.subr.bf16.mxu0 0
    %348 = vmatpush1.bf16.msra.mxu0 %v270
    %349 = vmatprep.subr.bf16.mxu0 0
    %350 = vmatpush1.bf16.msra.mxu0 %v271
    %351 = vmatprep.subr.bf16.mxu0 0
    %352 = vmatpush1.bf16.msra.mxu0 %v272
    %353 = vmatprep.mubr.bf16.mxu0 %v122
    %354 = vmatmul.mubr.bf16.gmra.mrb[0].mxu0 %v121
    %v355 = vpop.f32.mrb[0].mxu0
    %v356 = vadd.f32 %v113, %v355
    %v357 = vpop.f32.mrb[0].mxu0
    %v358 = vpop.f32.mrb[0].mxu0
    %v359 = vpop.f32.mrb[0].mxu0
    %360 = vdwg.mxu0
    %361 = vmatprep.subr.bf16.mxu0 0
    %362 = vmatpush1.bf16.msra.mxu0 %v273
    %363 = vmatprep.subr.bf16.mxu0 0
    %364 = vmatpush1.bf16.msra.mxu0 %v274
    %365 = vmatprep.subr.bf16.mxu0 0
    %366 = vmatpush1.bf16.msra.mxu0 %v275
    %367 = vmatprep.subr.bf16.mxu0 0
    %368 = vmatpush1.bf16.msra.mxu0 %v276
    %369 = vmatprep.subr.bf16.mxu0 0
    %370 = vmatpush1.bf16.msra.mxu0 %v277
    %371 = vmatprep.subr.bf16.mxu0 0
    %372 = vmatpush1.bf16.msra.mxu0 %v278
    %373 = vmatprep.subr.bf16.mxu0 0
    %374 = vmatpush1.bf16.msra.mxu0 %v279
    %375 = vmatprep.subr.bf16.mxu0 0
    %376 = vmatpush1.bf16.msra.mxu0 %v280
    %377 = vmatprep.subr.bf16.mxu0 0
    %378 = vmatpush1.bf16.msra.mxu0 %v281
    %379 = vmatprep.subr.bf16.mxu0 0
    %380 = vmatpush1.bf16.msra.mxu0 %v282
    %381 = vmatprep.subr.bf16.mxu0 0
    %382 = vmatpush1.bf16.msra.mxu0 %v283
    %383 = vmatprep.subr.bf16.mxu0 0
    %384 = vmatpush1.bf16.msra.mxu0 %v284
    %385 = vmatprep.subr.bf16.mxu0 0
    %386 = vmatpush1.bf16.msra.mxu0 %v285
    %387 = vmatprep.subr.bf16.mxu0 0
    %388 = vmatpush1.bf16.msra.mxu0 %v286
    %389 = vmatprep.subr.bf16.mxu0 0
    %390 = vmatpush1.bf16.msra.mxu0 %v287
    %391 = vmatprep.subr.bf16.mxu0 0
    %392 = vmatpush1.bf16.msra.mxu0 %v288
    %393 = vmatprep.mubr.bf16.mxu0 %v124
    %394 = vmatmul.mubr.bf16.gmra.mrb[0].mxu0 %v123
    %v395 = vpop.f32.mrb[0].mxu0
    %v396 = vadd.f32 %v356, %v395
    %v397 = vpop.f32.mrb[0].mxu0
    %v398 = vpop.f32.mrb[0].mxu0
    %v399 = vpop.f32.mrb[0].mxu0
    %400 = vdwg.mxu0
    %401 = vst [vmem:[#allocation7] sm:$0xff] %v396
    // Predicated region
    $region22: #{tpu_custom_call.1} parent=1 // pred_check
      _
    $region23: #{tpu_custom_call.1} parent=1 // pred_check_branch
      %403 = sbr.rel (0) target = $region25
    $region24: #{tpu_custom_call.1} parent=1 // pred_region
      %s405 = ssub.s32 128, 128
      %406 = vsyncadd [#allocation4], %s405
      %s408 = sshll.u32 [#allocation7], 4
      %s409 = int_to_ptr.vmem [resolvable:$true] %s408
      %411 = dma.vmem_to_hbm [thread:$0]  %s409, 128, %s3, [#allocation4]
    $region25: #{tpu_custom_call.1} parent=1 // pred_fallthru
      _
    // Predicated region
    $region26: #{tpu_custom_call.1} parent=1 // pred_check
      _
    $region27: #{tpu_custom_call.1} parent=1 // pred_check_branch
      %413 = sbr.rel (0) target = $region29
    $region28: #{tpu_custom_call.1} parent=1 // pred_region
      %414 = dma.done [#allocation4], 128
    $region29: #{tpu_custom_call.1} parent=1 // pred_fallthru
      _
    %415 = vsyncpa [#allocation3], 1
    %416 = vsyncpa [#allocation6], 1
    %417 = vsyncpa [#allocation4], 1

</llo_original>
